<compile_context>
chip_gen: v5e
topology: v5e:2x2
jax: 0.10.0
libtpu: 0.0.40
codegen_flags: <defaults>
</compile_context>

<pallas_src>
import jax
import jax.numpy as jnp
from jax.experimental import pallas as pl
from jax.experimental.pallas import tpu as pltpu

_TARGET_TILE_BYTES = 8 * 1024 * 1024   # per-tile DMA target (hides step overhead)
_VMEM_LIMIT_BYTES = 48 * 1024 * 1024   # 2x(in+out) 8 MiB buffers + headroom;
                                       # fits v7x's 64 MiB physical VMEM.


def _round_up(x, m):
    return ((x + m - 1) // m) * m


def _pos_emb_kernel(table_ref, out_ref):
    # table_ref: (TILE_S, D)    rows [i*TILE_S, (i+1)*TILE_S) of the table.
    # out_ref:   (1, TILE_S, D) output slab (0, i*TILE_S:(i+1)*TILE_S, :).
    # Full-tile unmasked copy; Pallas masks the (possibly partial) last block.
    out_ref[0, :, :] = table_ref[:, :]


def positional_embedding(input_ids, embedding_table):
    """Pallas equivalent of PositionalEmbedding.forward.

    Args:
      input_ids: (B, S) int array -- only its static sequence length is used.
      embedding_table: (max_seq_len, D) embedding weights.

    Returns:
      (1, S, D) positional embeddings (dtype follows the table).
    """
    seq_len = input_ids.shape[1]
    max_seq_len, emb_dim = embedding_table.shape
    assert seq_len <= max_seq_len, "sequence length exceeds max_seq_len"

    dt = jnp.dtype(embedding_table.dtype)
    itemsize = dt.itemsize
    # Packed-sublane multiple: 8 rows for 32-bit, 16 for bf16, 32 for int8/fp8.
    sub = 8 * max(1, 4 // itemsize)

    # Rows per tile: ~_TARGET_TILE_BYTES per DMA, rounded down to the packed
    # sublane multiple, never below one packed group, never (much) more than
    # the sequence actually needs.
    row_budget = max(sub, (_TARGET_TILE_BYTES // (emb_dim * itemsize)) // sub * sub)
    tile_s = min(row_budget, _round_up(seq_len, sub))

    grid = (pl.cdiv(seq_len, tile_s),)

    # Pure copy: S*D bytes read + S*D bytes written, zero flops.
    bytes_accessed = 2 * seq_len * emb_dim * itemsize

    out = pl.pallas_call(
        _pos_emb_kernel,
        out_shape=jax.ShapeDtypeStruct(
            (1, seq_len, emb_dim), embedding_table.dtype
        ),
        grid_spec=pl.GridSpec(
            grid=grid,
            # Full table passed in; index_map only reads blocks covering the
            # first seq_len rows, so no wrapper slice / extra HBM traffic.
            in_specs=[pl.BlockSpec((tile_s, emb_dim), lambda i: (i, 0))],
            out_specs=pl.BlockSpec((1, tile_s, emb_dim), lambda i: (0, i, 0)),
        ),
        compiler_params=pltpu.CompilerParams(
            dimension_semantics=("parallel",),
            vmem_limit_bytes=_VMEM_LIMIT_BYTES,
        ),
        cost_estimate=pl.CostEstimate(
            flops=0, transcendentals=0, bytes_accessed=bytes_accessed
        ),
    )(embedding_table)
    return out


if __name__ == "__main__":
    # Small, deterministic setup consistent with the module's __init__/forward.
    max_seq_len = 16
    embedding_dim = 128
    batch = 2
    seq = 8

    key = jax.random.PRNGKey(0)
    k_emb, k_ids = jax.random.split(key)

    # nn.Embedding weight ~ N(0, 1), deterministic here.
    embedding_table = jax.random.normal(
        k_emb, (max_seq_len, embedding_dim), dtype=jnp.float32
    )
    # input_ids (token ids) -- values are irrelevant to the forward, only shape.
    input_ids = jax.random.randint(k_ids, (batch, seq), 0, 100, dtype=jnp.int32)

    out = positional_embedding(input_ids, embedding_table)
    out = jax.block_until_ready(out)

    # Reference check (plain JAX): embedding lookup of arange(seq), batch dim 1.
    ref = embedding_table[jnp.arange(seq)][None, :, :]
    assert out.shape == (1, seq, embedding_dim), out.shape
    assert out.dtype == jnp.float32
    assert jnp.array_equal(out, ref), "mismatch vs reference"

    # Also exercise a sequence length that is NOT a sublane multiple: the
    # kernel keeps an 8-row tile and Pallas masks the partial last block.
    seq2 = 5
    ids2 = input_ids[:, :seq2]
    out2 = jax.block_until_ready(positional_embedding(ids2, embedding_table))
    ref2 = embedding_table[jnp.arange(seq2)][None, :, :]
    assert out2.shape == (1, seq2, embedding_dim), out2.shape
    assert jnp.array_equal(out2, ref2), "mismatch vs reference (partial tile)"

    print("KERNEL_OK")
</pallas_src>

<mosaic_0001>
module attributes {stable_mosaic.version = 11 : i64} {
  func.func @_pos_emb_kernel(%arg0: i32, %arg1: memref<8x128xf32, #tpu.memory_space<vmem>>, %arg2: memref<1x8x128xf32, #tpu.memory_space<vmem>>) attributes {dimension_semantics = [#tpu.dimension_semantics<parallel>], iteration_bounds = array<i64: 1>, scalar_prefetch = 0 : i64, scratch_operands = 0 : i64, tpu.core_type = #tpu.core_type<tc>, window_params = [{transform_indices = @transform_0, window_bounds = array<i64: 8, 128>}, {transform_indices = @transform_1, window_bounds = array<i64: 1, 8, 128>}]} {
    %c0 = arith.constant 0 : index
    %c0_0 = arith.constant 0 : index
    %0 = vector.load %arg1[%c0, %c0_0] : memref<8x128xf32, #tpu.memory_space<vmem>>, vector<8x128xf32>
    %c0_1 = arith.constant 0 : index
    %c0_2 = arith.constant 0 : index
    %c0_3 = arith.constant 0 : index
    %1 = vector.load %arg2[%c0_1, %c0_2, %c0_3] : memref<1x8x128xf32, #tpu.memory_space<vmem>>, vector<1x8x128xf32>
    %2 = vector.shape_cast %1 : vector<1x8x128xf32> to vector<8x128xf32>
    %3 = vector.shape_cast %0 : vector<8x128xf32> to vector<1x8x128xf32>
    tpu.vector_store %arg2[%c0_1, %c0_2, %c0_3], %3 {strides = array<i32>} : memref<1x8x128xf32, #tpu.memory_space<vmem>>, vector<1x8x128xf32>,
    return
  }
  func.func @transform_0(%arg0: i32) -> (i32, i32) {
    %c0_i32 = arith.constant 0 : i32
    %c0_i32_0 = arith.constant 0 : i32
    return %arg0, %c0_i32 : i32, i32
  }
  func.func @transform_1(%arg0: i32) -> (i32, i32, i32) {
    %c0_i32 = arith.constant 0 : i32
    %c0_i32_0 = arith.constant 0 : i32
    %c0_i32_1 = arith.constant 0 : i32
    return %c0_i32, %arg0, %c0_i32_0 : i32, i32, i32
  }
}

</mosaic_0001>

<llo_original>
// kernel: tpu_custom_call.1
$region0: #{tpu_custom_call.1}
  #allocation0 [shape = 'u32[]', space=smem, size = 0x4, offset = 0x4, fixed_abs, tag = 'smem constant byte address 0x4 - core index']
  #allocation1 [shape = 'u32[72,128]{1,0:T(1,128)}', space=vmem, size = 0x9000, scoped, tag = 'internal scratch']
  %s0 = inlined_call_operand.hbm [shape: f32[16,128], index: 0, kind: input, shape index: {}]
  %s1 = inlined_call_operand.hbm [shape: f32[1,8,128], index: 1, kind: output, shape index: {}]
  %s2 = sld [smem:[#allocation0]]
  $region18: #{tpu_custom_call.1} parent=0
    _
  %s4 = ssub.s32 1, %s2
  %s5 = scalar_select 0, %s4, %s2
  $region1: #{tpu_custom_call.1} parent=0
    #allocation2 [shape = 'u8[4096]{0}', space=vmem, size = 0x1000, scoped, tag = 'input window, operand 0, single buffered']
    #allocation3 [shape = 's32[1]{0}', space=sflag, size = 0x4, scoped, tag = 'scoped memory for tpu_custom_call.1']
    #allocation4 [shape = 's32[1]{0}', space=sflag, size = 0x4, scoped, tag = 'scoped memory for tpu_custom_call.1']
    #allocation5 [shape = 'u8[4096]{0}', space=vmem, size = 0x1000, scoped, tag = 'output window, operand 0, single buffered']
    %6 = vsyncpa [#allocation3], 0
    %7 = vsyncpa [#allocation4], 0
    // Predicated region
    $region2: #{tpu_custom_call.1} parent=1 // pred_check
      _
    $region3: #{tpu_custom_call.1} parent=1 // pred_check_branch
      %9 = sbr.rel (0) target = $region5
    $region4: #{tpu_custom_call.1} parent=1 // pred_region
      %11 = vsyncadd [#allocation3], 0
      %s13 = sshll.u32 %s0, 4
      %s14 = int_to_ptr.hbm [resolvable:$true] %s13
      %s15 = sshll.u32 [#allocation2], 4
      %s16 = int_to_ptr.vmem [resolvable:$true] %s15
      %18 = dma.hbm_to_vmem [thread:$0]  %s14, 128, %s16, [#allocation3]
    $region5: #{tpu_custom_call.1} parent=1 // pred_fallthru
      _
    // Predicated region
    $region6: #{tpu_custom_call.1} parent=1 // pred_check
      _
    $region7: #{tpu_custom_call.1} parent=1 // pred_check_branch
      %20 = sbr.rel (0) target = $region9
    $region8: #{tpu_custom_call.1} parent=1 // pred_region
      %22 = dma.done [#allocation3], 128
    $region9: #{tpu_custom_call.1} parent=1 // pred_fallthru
      _
    %v23 = vld [vmem:[#allocation2] sm:$0xff]
    %24 = vst [vmem:[#allocation5] sm:$0xff] %v23
    // Predicated region
    $region10: #{tpu_custom_call.1} parent=1 // pred_check
      _
    $region11: #{tpu_custom_call.1} parent=1 // pred_check_branch
      %26 = sbr.rel (0) target = $region13
    $region12: #{tpu_custom_call.1} parent=1 // pred_region
      %28 = vsyncadd [#allocation4], 0
      %s30 = sshll.u32 [#allocation5], 4
      %s31 = int_to_ptr.vmem [resolvable:$true] %s30
      %s32 = sshll.u32 %s1, 4
      %s33 = int_to_ptr.hbm [resolvable:$true] %s32
      %35 = dma.vmem_to_hbm [thread:$0]  %s31, 128, %s33, [#allocation4]
    $region13: #{tpu_custom_call.1} parent=1 // pred_fallthru
      _
    // Predicated region
    $region14: #{tpu_custom_call.1} parent=1 // pred_check
      _
    $region15: #{tpu_custom_call.1} parent=1 // pred_check_branch
      %37 = sbr.rel (0) target = $region17
    $region16: #{tpu_custom_call.1} parent=1 // pred_region
      %39 = dma.done [#allocation4], 128
    $region17: #{tpu_custom_call.1} parent=1 // pred_fallthru
      _
    %40 = vsyncpa [#allocation3], 1
    %41 = vsyncpa [#allocation4], 1

</llo_original>
